<compile_context>
chip_gen: v7x
topology: tpu7x:2x2x1
jax: 0.10.0
libtpu: 0.0.40
codegen_flags: <defaults>
</compile_context>

<pallas_src>
import math

import jax
import jax.numpy as jnp
from jax.experimental import pallas as pl
from jax.experimental.pallas import tpu as pltpu


def _pick_row_tile(hout):
    """Largest multiple-of-8 divisor of hout up to 256 (MXU-friendly M)."""
    for th in (256, 128, 64, 32, 16, 8):
        if hout % th == 0:
            return th
    return hout


def _make_conv_kernel(K, TH, WoC, apply_act, negative_slope):
    """Kernel body: K row-band matmuls, fused leaky-relu, lane-dense store."""

    def kernel(xf_ref, w_ref, o_ref):
        # xf_ref: (1, Hp, Wp*Cin)   padded, channel-flattened image (one batch)
        # w_ref : (K, Wp*Cin, Wout*Cout)  block-Toeplitz weight
        # o_ref : (1, TH, Wout*Cout)      one row tile of the output
        row0 = pl.program_id(1) * TH
        if TH % 8 == 0:
            row0 = pl.multiple_of(row0, 8)       # aligned sublane loads
        acc = jnp.zeros((TH, WoC), jnp.float32)
        for kh in range(K):  # K is tiny (3): static unroll over taps only
            xs = xf_ref[0, pl.ds(row0 + kh, TH), :]        # (TH, Wp*Cin)
            acc = acc + jnp.dot(xs, w_ref[kh],
                                preferred_element_type=jnp.float32)
        if apply_act:
            acc = jnp.where(acc >= 0, acc, negative_slope * acc)
        o_ref[0] = acc.astype(o_ref.dtype)

    return kernel


class RelaxedTimeRevGroupConv2dPallas:
    """JAX/Pallas port of RelaxedTimeRev_GroupConv2d (forward only)."""

    def __init__(self, in_channels, out_channels, kernel_size, num_filter_banks,
                 activation, key):
        self.in_channels = in_channels
        self.out_channels = out_channels
        self.kernel_size = kernel_size
        self.num_filter_banks = num_filter_banks
        self.activation = activation

        # kernel: (N, O, I, 2, K, K); kaiming_uniform(a=sqrt(5)) -> bound = 1/sqrt(fan_in)
        fan_in = out_channels * in_channels * 2 * kernel_size * kernel_size
        bound = 1.0 / math.sqrt(fan_in)
        self.kernel = jax.random.uniform(
            key,
            (num_filter_banks, out_channels, in_channels, 2, kernel_size, kernel_size),
            minval=-bound, maxval=bound, dtype=jnp.float32)
        # relaxed_weights: (N, 2), initialized to ones
        self.relaxed_weights = jnp.ones((num_filter_banks, 2), jnp.float32)

        # Jit the whole forward (fuses all glue reshapes around the kernel).
        self._fwd = jax.jit(self._forward)

    # ---- glue: combined conv weight exactly like the torch module -------------
    def _combined_weight(self):
        k = self.kernel                                   # (N, O, I, 2, K, K)
        flipped = k[:, :, :, ::-1, ::-1, :]               # torch.flip(dims=[3, 4])
        fb = jnp.stack([k, flipped], axis=2)              # (N, O, 2, I, 2, K, K)
        w = jnp.einsum('ng,nogiakl->ogiakl', self.relaxed_weights, fb)  # (O,2,I,2,K,K)
        Cout = self.out_channels * 2
        Cin = self.in_channels * 2
        return w.reshape(Cout, Cin, self.kernel_size, self.kernel_size)  # OIHW

    # ---- glue: block-Toeplitz expansion over the W axis ------------------------
    def _toeplitz_weight(self, w_hwio, Wp, Wout):
        # w_hwio: (K, K, Cin, Cout)
        # returns W_toep: (K, Wp*Cin, Wout*Cout) with
        #   W_toep[kh, wp*Cin+ci, w*Cout+co] = w_hwio[kh, wp-w, ci, co] if 0<=wp-w<K else 0
        K = self.kernel_size
        Cin = self.in_channels * 2
        Cout = self.out_channels * 2
        wp = jnp.arange(Wp)[:, None]                       # (Wp, 1)
        w = jnp.arange(Wout)[None, :]                      # (1, Wout)
        kw = wp - w                                        # (Wp, Wout)
        valid = (kw >= 0) & (kw < K)
        kw_c = jnp.clip(kw, 0, K - 1)
        big = w_hwio[:, kw_c, :, :]                        # (K, Wp, Wout, Cin, Cout)
        big = big * valid[None, :, :, None, None].astype(w_hwio.dtype)
        big = jnp.transpose(big, (0, 1, 3, 2, 4))          # (K, Wp, Cin, Wout, Cout)
        return big.reshape(K, Wp * Cin, Wout * Cout)

    # ---- forward using the Pallas kernel ---------------------------------------
    def _forward(self, x):
        # x: (B, in_channels, 2, H, W)
        B, H, W = x.shape[0], x.shape[-2], x.shape[-1]
        K = self.kernel_size
        pad = (K - 1) // 2
        Cin = self.in_channels * 2
        Cout = self.out_channels * 2
        Hp, Wp = H + 2 * pad, W + 2 * pad
        Hout, Wout = Hp - K + 1, Wp - K + 1
        WpC = Wp * Cin
        WoC = Wout * Cout

        # Same reshape as torch, then NHWC, pad, and flatten (W, Cin) into lanes.
        x2 = x.reshape(B, Cin, H, W)
        x_nhwc = jnp.transpose(x2, (0, 2, 3, 1))           # (B, H, W, Cin)
        x_pad = jnp.pad(x_nhwc, ((0, 0), (pad, pad), (pad, pad), (0, 0)))
        x_flat = x_pad.reshape(B, Hp, WpC)                 # (B, Hp, Wp*Cin)

        w_oihw = self._combined_weight()                   # (Cout, Cin, K, K)
        w_hwio = jnp.transpose(w_oihw, (2, 3, 1, 0))       # (K, K, Cin, Cout)
        w_big = self._toeplitz_weight(w_hwio, Wp, Wout)    # (K, Wp*Cin, Wout*Cout)

        TH = _pick_row_tile(Hout)
        nt = Hout // TH

        kernel_fn = _make_conv_kernel(K, TH, WoC, self.activation, 0.01)

        out_flat = pl.pallas_call(
            kernel_fn,
            out_shape=jax.ShapeDtypeStruct((B, Hout, WoC), x.dtype),
            grid=(B, nt),
            in_specs=[
                pl.BlockSpec((1, Hp, WpC), lambda b, t: (b, 0, 0)),
                pl.BlockSpec((K, WpC, WoC), lambda b, t: (0, 0, 0)),
            ],
            out_specs=pl.BlockSpec((1, TH, WoC), lambda b, t: (b, t, 0)),
            compiler_params=pltpu.CompilerParams(
                dimension_semantics=("parallel", "parallel")),
        )(x_flat, w_big)

        out = out_flat.reshape(B, Hout, Wout, Cout)        # un-flatten lanes
        out = jnp.transpose(out, (0, 3, 1, 2))             # (B, Cout, Hout, Wout)
        return out.reshape(B, self.out_channels, 2, Hout, Wout)

    def __call__(self, x):
        return self._fwd(x)

    # ---- pure-JAX reference (for correctness check only) -----------------------
    def reference(self, x):
        B, H, W = x.shape[0], x.shape[-2], x.shape[-1]
        K = self.kernel_size
        pad = (K - 1) // 2
        Cin = self.in_channels * 2
        x2 = x.reshape(B, Cin, H, W)
        x_nhwc = jnp.transpose(x2, (0, 2, 3, 1))
        w_hwio = jnp.transpose(self._combined_weight(), (2, 3, 1, 0))
        out = jax.lax.conv_general_dilated(
            x_nhwc, w_hwio, window_strides=(1, 1),
            padding=[(pad, pad), (pad, pad)],
            dimension_numbers=('NHWC', 'HWIO', 'NHWC'))
        if self.activation:
            out = jnp.where(out >= 0, out, 0.01 * out)
        out = jnp.transpose(out, (0, 3, 1, 2))
        return out.reshape(B, self.out_channels, 2, out.shape[-2], out.shape[-1])


if __name__ == "__main__":
    key = jax.random.PRNGKey(0)
    k_param, k_x = jax.random.split(key)

    in_channels, out_channels = 3, 4
    kernel_size, num_filter_banks = 3, 2
    B, H, W = 2, 16, 16

    module = RelaxedTimeRevGroupConv2dPallas(
        in_channels, out_channels, kernel_size, num_filter_banks,
        activation=True, key=k_param)

    x = jax.random.normal(k_x, (B, in_channels, 2, H, W), dtype=jnp.float32)

    out = module(x)
    out = jax.block_until_ready(out)

    ref = jax.block_until_ready(module.reference(x))
    assert out.shape == (B, out_channels, 2, H, W), out.shape
    max_err = float(jnp.max(jnp.abs(out - ref)))
    assert jnp.allclose(out, ref, atol=1e-3, rtol=1e-3), max_err

    print("KERNEL_OK")
</pallas_src>

<mosaic_0001>
module attributes {stable_mosaic.version = 11 : i64} {
  func.func @kernel(%arg0: i32, %arg1: i32, %arg2: memref<1x18x108xf32, #tpu.memory_space<vmem>>, %arg3: memref<3x108x128xf32, #tpu.memory_space<vmem>>, %arg4: memref<1x16x128xf32, #tpu.memory_space<vmem>>) attributes {dimension_semantics = [#tpu.dimension_semantics<parallel>, #tpu.dimension_semantics<parallel>], iteration_bounds = array<i64: 2, 1>, scalar_prefetch = 0 : i64, scratch_operands = 0 : i64, tpu.core_type = #tpu.core_type<tc>, window_params = [{transform_indices = @transform_0, window_bounds = array<i64: 1, 18, 108>}, {pipeline_mode = #tpu.pipeline_mode<synchronous>, transform_indices = @transform_1, window_bounds = array<i64: 3, 108, 128>}, {transform_indices = @transform_2, window_bounds = array<i64: 1, 16, 128>}]} {
    %c16_i32 = arith.constant 16 : i32
    %0 = arith.muli %arg1, %c16_i32 : i32
    %1 = tpu.assume_multiple %0, 8 : i32
    %cst = arith.constant 0.000000e+00 : f32
    %2 = vector.broadcast %cst : f32 to vector<16x128xf32>
    %c0_i32 = arith.constant 0 : i32
    %3 = arith.addi %1, %c0_i32 : i32
    %c0 = arith.constant 0 : index
    %4 = arith.index_cast %3 : i32 to index
    %c0_0 = arith.constant 0 : index
    %5 = vector.load %arg2[%c0, %4, %c0_0] : memref<1x18x108xf32, #tpu.memory_space<vmem>>, vector<1x16x108xf32>
    %6 = vector.shape_cast %5 : vector<1x16x108xf32> to vector<16x108xf32>
    %c0_1 = arith.constant 0 : index
    %c0_2 = arith.constant 0 : index
    %c0_3 = arith.constant 0 : index
    %7 = vector.load %arg3[%c0_1, %c0_2, %c0_3] : memref<3x108x128xf32, #tpu.memory_space<vmem>>, vector<1x108x128xf32>
    %8 = vector.shape_cast %7 : vector<1x108x128xf32> to vector<108x128xf32>
    %cst_4 = arith.constant dense<0.000000e+00> : vector<16x128xf32>
    %9 = tpu.matmul %6, %8, %cst_4 {dimension_numbers = #tpu.dot_dimension_numbers<[1], [0], [0], [1], [0, 0, 1, 1], [], []>} : vector<16x108xf32>, vector<108x128xf32>, vector<16x128xf32> -> vector<16x128xf32>
    %10 = arith.addf %2, %9 : vector<16x128xf32>
    %c1_i32 = arith.constant 1 : i32
    %11 = arith.addi %1, %c1_i32 : i32
    %c0_5 = arith.constant 0 : index
    %12 = arith.index_cast %11 : i32 to index
    %c0_6 = arith.constant 0 : index
    %13 = vector.load %arg2[%c0_5, %12, %c0_6] : memref<1x18x108xf32, #tpu.memory_space<vmem>>, vector<1x16x108xf32>
    %14 = vector.shape_cast %13 : vector<1x16x108xf32> to vector<16x108xf32>
    %c1 = arith.constant 1 : index
    %c0_7 = arith.constant 0 : index
    %c0_8 = arith.constant 0 : index
    %15 = vector.load %arg3[%c1, %c0_7, %c0_8] : memref<3x108x128xf32, #tpu.memory_space<vmem>>, vector<1x108x128xf32>
    %16 = vector.shape_cast %15 : vector<1x108x128xf32> to vector<108x128xf32>
    %cst_9 = arith.constant dense<0.000000e+00> : vector<16x128xf32>
    %17 = tpu.matmul %14, %16, %cst_9 {dimension_numbers = #tpu.dot_dimension_numbers<[1], [0], [0], [1], [0, 0, 1, 1], [], []>} : vector<16x108xf32>, vector<108x128xf32>, vector<16x128xf32> -> vector<16x128xf32>
    %18 = arith.addf %10, %17 : vector<16x128xf32>
    %c2_i32 = arith.constant 2 : i32
    %19 = arith.addi %1, %c2_i32 : i32
    %c0_10 = arith.constant 0 : index
    %20 = arith.index_cast %19 : i32 to index
    %c0_11 = arith.constant 0 : index
    %21 = vector.load %arg2[%c0_10, %20, %c0_11] : memref<1x18x108xf32, #tpu.memory_space<vmem>>, vector<1x16x108xf32>
    %22 = vector.shape_cast %21 : vector<1x16x108xf32> to vector<16x108xf32>
    %c2 = arith.constant 2 : index
    %c0_12 = arith.constant 0 : index
    %c0_13 = arith.constant 0 : index
    %23 = vector.load %arg3[%c2, %c0_12, %c0_13] : memref<3x108x128xf32, #tpu.memory_space<vmem>>, vector<1x108x128xf32>
    %24 = vector.shape_cast %23 : vector<1x108x128xf32> to vector<108x128xf32>
    %cst_14 = arith.constant dense<0.000000e+00> : vector<16x128xf32>
    %25 = tpu.matmul %22, %24, %cst_14 {dimension_numbers = #tpu.dot_dimension_numbers<[1], [0], [0], [1], [0, 0, 1, 1], [], []>} : vector<16x108xf32>, vector<108x128xf32>, vector<16x128xf32> -> vector<16x128xf32>
    %26 = arith.addf %18, %25 : vector<16x128xf32>
    %cst_15 = arith.constant 0.000000e+00 : f32
    %27 = vector.broadcast %cst_15 : f32 to vector<16x128xf32>
    %28 = arith.cmpf oge, %26, %27 : vector<16x128xf32>
    %cst_16 = arith.constant 0.00999999977 : f32
    %29 = vector.broadcast %cst_16 : f32 to vector<16x128xf32>
    %30 = arith.mulf %29, %26 : vector<16x128xf32>
    %31 = arith.select %28, %26, %30 : vector<16x128xi1>, vector<16x128xf32>
    %c0_17 = arith.constant 0 : index
    %c0_18 = arith.constant 0 : index
    %c0_19 = arith.constant 0 : index
    %32 = vector.load %arg4[%c0_17, %c0_18, %c0_19] : memref<1x16x128xf32, #tpu.memory_space<vmem>>, vector<1x16x128xf32>
    %33 = vector.shape_cast %32 : vector<1x16x128xf32> to vector<16x128xf32>
    %34 = vector.shape_cast %31 : vector<16x128xf32> to vector<1x16x128xf32>
    tpu.vector_store %arg4[%c0_17, %c0_18, %c0_19], %34 {strides = array<i32>} : memref<1x16x128xf32, #tpu.memory_space<vmem>>, vector<1x16x128xf32>,
    return
  }
  func.func @transform_0(%arg0: i32, %arg1: i32) -> (i32, i32, i32) {
    %c0_i32 = arith.constant 0 : i32
    %c0_i32_0 = arith.constant 0 : i32
    %c0_i32_1 = arith.constant 0 : i32
    return %arg0, %c0_i32, %c0_i32_0 : i32, i32, i32
  }
  func.func @transform_1(%arg0: i32, %arg1: i32) -> (i32, i32, i32) {
    %c0_i32 = arith.constant 0 : i32
    %c0_i32_0 = arith.constant 0 : i32
    %c0_i32_1 = arith.constant 0 : i32
    %c0_i32_2 = arith.constant 0 : i32
    return %c0_i32, %c0_i32_0, %c0_i32_1 : i32, i32, i32
  }
  func.func @transform_2(%arg0: i32, %arg1: i32) -> (i32, i32, i32) {
    %c0_i32 = arith.constant 0 : i32
    %c0_i32_0 = arith.constant 0 : i32
    return %arg0, %arg1, %c0_i32 : i32, i32, i32
  }
}

</mosaic_0001>

<llo_original>
// kernel: _forward.1
$region0: #{_forward.1}
  #allocation0 [shape = 'u32[]', space=smem, size = 0x4, offset = 0x4, fixed_abs, tag = 'smem constant byte address 0x4 - core index']
  #allocation1 [shape = 'u32[144,128]{1,0:T(1,128)}', space=vmem, size = 0x12000, scoped, tag = 'internal scratch']
  %s0 = inlined_call_operand.vmem [shape: f32[2,18,108], index: 0, kind: input, shape index: {}]
  %s1 = inlined_call_operand.vmem [shape: f32[3,108,128], index: 1, kind: input, shape index: {}]
  %s2 = inlined_call_operand.vmem [shape: f32[2,16,128], index: 2, kind: output, shape index: {}]
  %s3 = sld [smem:[#allocation0]]
  $region41: #{_forward.1} parent=0
    _
  %s5 = ssub.s32 1, %s3
  %s6 = scalar_select 0, %s5, %s3
  loop: start=0, step=1, limit=4
  $region2: #{_forward.1} parent=0 // loop_pre_header
    _
  $region3: #{_forward.1} parent=0 // loop_header
    %s8 = sphi 0, %s12
    %p9 = scmp.ge.s32.totalorder %s8, 4
    %s15 = sphi 0, %s27
    %s16 = sphi 0, %s23
    %s17 = sphi 0, %s15
    %s18 = sphi 0, %s16
    %s19 = sphi 0, %s17
    %s20 = sphi 0, %s18
    %s30 = sphi 0, %s32
    %s33 = sphi 0, %s30
    %s34 = sphi 0, %s33
    %s50 = sphi 0, %s34
    %s54 = sphi 0, %s54
    %s56 = sphi 0, %s54
    %s57 = sphi 0, %s56
    %s71 = sphi 0, %s57
    %s79 = sphi 0, %s81
    %s82 = sphi 0, %s79
    %s83 = sphi 0, %s82
    %s99 = sphi 0, %s83
  $region4: #{_forward.1} parent=0 // loop_header_branch
    %11 = sbr.rel (%p9) target = $region8
  $region5: #{_forward.1} parent=0 // loop_body
    %s13 = ssub.s32 %s8, 1
    %s14 = ssub.s32 %s8, 2
    %s21 = sadd.s32 1, %s16
    %p22 = scmp.ge.s32.totalorder %s21, 1
    %s23 = scalar_select %p22, 0, %s21
    %s24 = sadd.s32 1, %s15
    %s25 = scalar_select %p22, %s24, %s15
    %p26 = scmp.ge.s32.totalorder %s25, 2
    %s27 = scalar_select %p26, 0, %s25
    %s28 = ssub.s32 %s15, %s27
    %p29 = scmp.eq.s32.totalorder %s28, 0
    %s31 = sadd.s32 %s30, 1
    %s32 = scalar_select %p29, %s30, %s31
    %p35 = pneg %p29
    %p36 = scmp.eq.s32.totalorder %s8, 1
    %p37 = por %p35, %p36
    %p38 = scmp.ne.s32.totalorder %s30, %s33
    %p39 = scmp.eq.s32.totalorder %s8, 0
    %p40 = por %p38, %p39
    %p41 = scmp.ne.s32.totalorder %s30, %s33
    %p42 = scmp.eq.s32.totalorder %s13, 1
    %p43 = por %p41, %p42
    %p44 = scmp.ne.s32.totalorder %s33, %s34
    %p45 = scmp.eq.s32.totalorder %s13, 0
    %p46 = por %p44, %p45
    %p47 = scmp.ne.s32.totalorder %s33, %s34
    %p48 = scmp.eq.s32.totalorder %s14, 1
    %p49 = por %p47, %p48
    %p51 = scmp.ne.s32.totalorder %s34, %s50
    %p52 = scmp.eq.s32.totalorder %s14, 0
    %p53 = por %p51, %p52
    %s55 = sadd.s32 %s54, 1
    %p58 = scmp.eq.s32.totalorder %s8, 1
    %p59 = scmp.ne.s32.totalorder %s54, %s56
    %p60 = scmp.eq.s32.totalorder %s8, 0
    %p61 = por %p59, %p60
    %p62 = scmp.ne.s32.totalorder %s54, %s56
    %p63 = scmp.eq.s32.totalorder %s13, 1
    %p64 = por %p62, %p63
    %p65 = scmp.ne.s32.totalorder %s56, %s57
    %p66 = scmp.eq.s32.totalorder %s13, 0
    %p67 = por %p65, %p66
    %p68 = scmp.ne.s32.totalorder %s56, %s57
    %p69 = scmp.eq.s32.totalorder %s14, 1
    %p70 = por %p68, %p69
    %p72 = scmp.ne.s32.totalorder %s57, %s71
    %p73 = scmp.eq.s32.totalorder %s14, 0
    %p74 = por %p72, %p73
    %s75 = ssub.s32 %s15, %s27
    %s76 = ssub.s32 %s16, %s23
    %s77 = sor.u32 %s75, %s76
    %p78 = scmp.eq.s32.totalorder %s77, 0
    %s80 = sadd.s32 %s79, 1
    %s81 = scalar_select %p78, %s79, %s80
    %p84 = pneg %p78
    %p85 = scmp.eq.s32.totalorder %s8, 1
    %p86 = por %p84, %p85
    %p87 = scmp.ne.s32.totalorder %s79, %s82
    %p88 = scmp.eq.s32.totalorder %s8, 0
    %p89 = por %p87, %p88
    %p90 = scmp.ne.s32.totalorder %s79, %s82
    %p91 = scmp.eq.s32.totalorder %s13, 1
    %p92 = por %p90, %p91
    %p93 = scmp.ne.s32.totalorder %s82, %s83
    %p94 = scmp.eq.s32.totalorder %s13, 0
    %p95 = por %p93, %p94
    %p96 = scmp.ne.s32.totalorder %s82, %s83
    %p97 = scmp.eq.s32.totalorder %s14, 1
    %p98 = por %p96, %p97
    %p100 = scmp.ne.s32.totalorder %s83, %s99
    %p101 = scmp.eq.s32.totalorder %s14, 0
    %p102 = por %p100, %p101
    %p103 = scmp.le.s32.totalorder 1, %s8
    %p104 = scmp.lt.s32.totalorder %s8, 3
    %p105 = pnand %p103, %p104
    %p106 = pneg %p105
    // Predicated region
    $region9: #{_forward.1} parent=5 // pred_check
      _
    $region10: #{_forward.1} parent=5 // pred_check_branch
      %108 = sbr.rel (%p105) target = $region12
    $region11: #{_forward.1} parent=5 // pred_region
      %s109 = ssub.s32 %s8, 1
      // Predicated region
      $region13: #{_forward.1} parent=11 // pred_check
        %p110 = pneg %p67
      $region14: #{_forward.1} parent=11 // pred_check_branch
        %112 = sbr.rel (%p110) target = $region16
      $region15: #{_forward.1} parent=11 // pred_region
        _
      $region16: #{_forward.1} parent=11 // pred_fallthru
        _
    $region12: #{_forward.1} parent=5 // pred_fallthru
      _
    %p113 = scmp.lt.s32.totalorder %s8, 2
    // Predicated region
    $region17: #{_forward.1} parent=5 // pred_check
      %p114 = pneg %p113
    $region18: #{_forward.1} parent=5 // pred_check_branch
      %116 = sbr.rel (%p114) target = $region20
    $region19: #{_forward.1} parent=5 // pred_region
      // Predicated region
      $region21: #{_forward.1} parent=19 // pred_check
        %p117 = pneg %p40
      $region22: #{_forward.1} parent=19 // pred_check_branch
        %119 = sbr.rel (%p117) target = $region24
      $region23: #{_forward.1} parent=19 // pred_region
        %p120 = scmp.lt.s32.totalorder %s15, 1
        %s121 = scalar_select %p120, %s15, 1
        %s122 = smul.addr %s121, 3
        %s123 = smul.addr %s122, 8
        %s124 = scalar_lea.vmem %s0, %s123
      $region24: #{_forward.1} parent=19 // pred_fallthru
        _
    $region20: #{_forward.1} parent=5 // pred_fallthru
      _
    %p125 = scmp.le.s32.totalorder 1, %s8
    %p126 = scmp.lt.s32.totalorder %s8, 3
    %p127 = pnand %p125, %p126
    %p128 = pneg %p127
    // Predicated region
    $region25: #{_forward.1} parent=5 // pred_check
      _
    $region26: #{_forward.1} parent=5 // pred_check_branch
      %130 = sbr.rel (%p127) target = $region28
    $region27: #{_forward.1} parent=5 // pred_region
      %s131 = ssub.s32 %s8, 1
      %p132 = scmp.lt.s32.totalorder %s17, 1
      %s133 = scalar_select %p132, %s17, 1
      %s134 = smul.addr %s133, 3
      %s135 = smul.addr %s134, 8
      %s136 = scalar_lea.vmem %s0, %s135
      %p137 = pneg %p46
      %p138 = pneg %p43
      %p139 = pneg %p67
      %p140 = pneg %p64
      %p141 = pneg %p95
      %p142 = pneg %p92
      %s143 = smul.u32 2, %s18
      %p144 = scmp.lt.s32.totalorder %s17, 1
      %s145 = scalar_select %p144, %s17, 1
      %p146 = scmp.lt.s32.totalorder %s143, 1
      %s147 = scalar_select %p146, %s143, 1
      %s148 = smul.addr %s145, 2
      %s149 = sadd.s32 %s147, %s148
      %s150 = smul.addr %s149, 8
      %s151 = scalar_lea.vmem %s2, %s150
      %p152 = scmp.lt.s32.totalorder %s17, 1
      %s153 = scalar_select %p152, %s17, 1
      %s154 = smul.addr %s153, 3
      %s155 = smul.addr %s154, 8
      %s156 = scalar_lea.vmem %s0, %s155
      %s157 = smul.u32 2, %s18
      %p158 = scmp.lt.s32.totalorder %s17, 1
      %s159 = scalar_select %p158, %s17, 1
      %p160 = scmp.lt.s32.totalorder %s157, 1
      %s161 = scalar_select %p160, %s157, 1
      %s162 = smul.addr %s159, 2
      %s163 = sadd.s32 %s161, %s162
      %s164 = smul.addr %s163, 8
      %s165 = scalar_lea.vmem %s2, %s164
      %s166 = smul.u32 2, %s18
      %s167 = smul.u32 %s18, 16
      %s168 = scalar_lea.vmem %s156, %s167
      %v169 = vld [vmem:[%s168] sm:$0xff]
      %v170 = vld [vmem:[%s168 + $0x8] sm:$0xff]
      %v171 = vld [vmem:[%s1] sm:$0xff]
      %v172 = vld [vmem:[%s1 + $0x8] sm:$0xff]
      %v173 = vld [vmem:[%s1 + $0x10] sm:$0xff]
      %v174 = vld [vmem:[%s1 + $0x18] sm:$0xff]
      %v175 = vld [vmem:[%s1 + $0x20] sm:$0xff]
      %v176 = vld [vmem:[%s1 + $0x28] sm:$0xff]
      %v177 = vld [vmem:[%s1 + $0x30] sm:$0xff]
      %v178 = vld [vmem:[%s1 + $0x38] sm:$0xff]
      %v179 = vld [vmem:[%s1 + $0x40] sm:$0xff]
      %v180 = vld [vmem:[%s1 + $0x48] sm:$0xff]
      %v181 = vld [vmem:[%s1 + $0x50] sm:$0xff]
      %v182 = vld [vmem:[%s1 + $0x58] sm:$0xff]
      %v183 = vld [vmem:[%s1 + $0x60] sm:$0xff]
      %v184 = vld [vmem:[%s1 + $0x68] sm:$0xf]
      %s185 = sadd.s32 %s167, 1
      %s186 = scalar_lea.vmem %s156, %s185
      %v187 = vld [vmem:[%s186] sm:$0xff]
      %v188 = vld [vmem:[%s186 + $0x8] sm:$0xff]
      %s189 = scalar_lea.vmem %s1, 112
      %v190 = vld [vmem:[%s189] sm:$0xff]
      %v191 = vld [vmem:[%s189 + $0x8] sm:$0xff]
      %v192 = vld [vmem:[%s189 + $0x10] sm:$0xff]
      %v193 = vld [vmem:[%s189 + $0x18] sm:$0xff]
      %v194 = vld [vmem:[%s189 + $0x20] sm:$0xff]
      %v195 = vld [vmem:[%s189 + $0x28] sm:$0xff]
      %v196 = vld [vmem:[%s189 + $0x30] sm:$0xff]
      %v197 = vld [vmem:[%s189 + $0x38] sm:$0xff]
      %v198 = vld [vmem:[%s189 + $0x40] sm:$0xff]
      %v199 = vld [vmem:[%s189 + $0x48] sm:$0xff]
      %v200 = vld [vmem:[%s189 + $0x50] sm:$0xff]
      %v201 = vld [vmem:[%s189 + $0x58] sm:$0xff]
      %v202 = vld [vmem:[%s189 + $0x60] sm:$0xff]
      %v203 = vld [vmem:[%s189 + $0x68] sm:$0xf]
      %vm204 = vcmask 883712
      %v206 = vsel %vm204, %v187, 0
      %v209 = vsel %vm204, %v188, 0
      %vm211 = vcmask 1043456
      %v213 = vsel %vm211, %v203, 0
      %215 = vmatprep.subr.mxu0 0.0
      %216 = vmatpush1.msra.mxu0 %v190
      %217 = vmatprep.subr.mxu0 0.0
      %218 = vmatpush1.msra.mxu0 %v191
      %219 = vmatprep.subr.mxu0 0.0
      %220 = vmatpush1.msra.mxu0 %v192
      %221 = vmatprep.subr.mxu0 0.0
      %222 = vmatpush1.msra.mxu0 %v193
      %223 = vmatprep.subr.mxu0 0.0
      %224 = vmatpush1.msra.mxu0 %v194
      %225 = vmatprep.subr.mxu0 0.0
      %226 = vmatpush1.msra.mxu0 %v195
      %227 = vmatprep.subr.mxu0 0.0
      %228 = vmatpush1.msra.mxu0 %v196
      %229 = vmatprep.subr.mxu0 0.0
      %230 = vmatpush1.msra.mxu0 %v197
      %231 = vmatprep.subr.mxu0 0.0
      %232 = vmatpush1.msra.mxu0 %v198
      %233 = vmatprep.subr.mxu0 0.0
      %234 = vmatpush1.msra.mxu0 %v199
      %235 = vmatprep.subr.mxu0 0.0
      %236 = vmatpush1.msra.mxu0 %v200
      %237 = vmatprep.subr.mxu0 0.0
      %238 = vmatpush1.msra.mxu0 %v201
      %239 = vmatprep.subr.mxu0 0.0
      %240 = vmatpush1.msra.mxu0 %v202
      %241 = vmatprep.subr.mxu0 0.0
      %242 = vmatpush1.msra.mxu0 %v213
      %243 = vmatprep.subr.mxu0 0.0
      %244 = vmatpush1.msra.mxu0 0.0
      %245 = vmatprep.subr.mxu0 0.0
      %246 = vmatpush1.msra.mxu0 0.0
      %247 = vmatprep.subr.mxu0 0.0
      %248 = vmatpush1.msra.mxu0 0.0
      %249 = vmatprep.subr.mxu0 0.0
      %250 = vmatpush1.msra.mxu0 0.0
      %251 = vmatprep.subr.mxu0 0.0
      %252 = vmatpush1.msra.mxu0 0.0
      %253 = vmatprep.subr.mxu0 0.0
      %254 = vmatpush1.msra.mxu0 0.0
      %255 = vmatprep.subr.mxu0 0.0
      %256 = vmatpush1.msra.mxu0 0.0
      %257 = vmatprep.subr.mxu0 0.0
      %258 = vmatpush1.msra.mxu0 0.0
      %259 = vmatprep.subr.mxu0 0.0
      %260 = vmatpush1.msra.mxu0 0.0
      %261 = vmatprep.subr.mxu0 0.0
      %262 = vmatpush1.msra.mxu0 0.0
      %263 = vmatprep.subr.mxu0 0.0
      %264 = vmatpush1.msra.mxu0 0.0
      %265 = vmatprep.subr.mxu0 0.0
      %266 = vmatpush1.msra.mxu0 0.0
      %267 = vmatprep.subr.mxu0 0.0
      %268 = vmatpush1.msra.mxu0 0.0
      %269 = vmatprep.subr.mxu0 0.0
      %270 = vmatpush1.msra.mxu0 0.0
      %271 = vmatprep.subr.mxu0 0.0
      %272 = vmatpush1.msra.mxu0 0.0
      %273 = vmatprep.subr.mxu0 0.0
      %274 = vmatpush1.msra.mxu0 0.0
      %275 = vmatprep.subr.mxu0 0.0
      %276 = vmatpush1.msra.mxu0 0.0
      %277 = vmatprep.subr.mxu0 0.0
      %278 = vmatpush1.msra.mxu0 0.0
      %279 = vmatprep.mubr.f32.mxu0 0.0
      %280 = vmatmul.mubr.f32.gmra.mrb[0].mxu0 %v206
      %v281 = vpop.f32.mrb[0].mxu0
      %v282 = vadd.f32 0.0, %v281
      %v283 = vpop.f32.mrb[0].mxu0
      %284 = vmatprep.mubr.f32.mxu0 0.0
      %285 = vmatmul.mubr.f32.gmra.mrb[0].mxu0 %v209
      %v286 = vpop.f32.mrb[0].mxu0
      %v287 = vadd.f32 0.0, %v286
      %v288 = vpop.f32.mrb[0].mxu0
      %289 = vdwg.mxu0
      %v291 = vsel %vm204, %v169, 0
      %v294 = vsel %vm204, %v170, 0
      %v297 = vsel %vm211, %v184, 0
      %299 = vmatprep.subr.mxu0 0.0
      %300 = vmatpush1.msra.mxu0 %v171
      %301 = vmatprep.subr.mxu0 0.0
      %302 = vmatpush1.msra.mxu0 %v172
      %303 = vmatprep.subr.mxu0 0.0
      %304 = vmatpush1.msra.mxu0 %v173
      %305 = vmatprep.subr.mxu0 0.0
      %306 = vmatpush1.msra.mxu0 %v174
      %307 = vmatprep.subr.mxu0 0.0
      %308 = vmatpush1.msra.mxu0 %v175
      %309 = vmatprep.subr.mxu0 0.0
      %310 = vmatpush1.msra.mxu0 %v176
      %311 = vmatprep.subr.mxu0 0.0
      %312 = vmatpush1.msra.mxu0 %v177
      %313 = vmatprep.subr.mxu0 0.0
      %314 = vmatpush1.msra.mxu0 %v178
      %315 = vmatprep.subr.mxu0 0.0
      %316 = vmatpush1.msra.mxu0 %v179
      %317 = vmatprep.subr.mxu0 0.0
      %318 = vmatpush1.msra.mxu0 %v180
      %319 = vmatprep.subr.mxu0 0.0
      %320 = vmatpush1.msra.mxu0 %v181
      %321 = vmatprep.subr.mxu0 0.0
      %322 = vmatpush1.msra.mxu0 %v182
      %323 = vmatprep.subr.mxu0 0.0
      %324 = vmatpush1.msra.mxu0 %v183
      %325 = vmatprep.subr.mxu0 0.0
      %326 = vmatpush1.msra.mxu0 %v297
      %327 = vmatprep.subr.mxu0 0.0
      %328 = vmatpush1.msra.mxu0 0.0
      %329 = vmatprep.subr.mxu0 0.0
      %330 = vmatpush1.msra.mxu0 0.0
      %331 = vmatprep.subr.mxu0 0.0
      %332 = vmatpush1.msra.mxu0 0.0
      %333 = vmatprep.subr.mxu0 0.0
      %334 = vmatpush1.msra.mxu0 0.0
      %335 = vmatprep.subr.mxu0 0.0
      %336 = vmatpush1.msra.mxu0 0.0
      %337 = vmatprep.subr.mxu0 0.0
      %338 = vmatpush1.msra.mxu0 0.0
      %339 = vmatprep.subr.mxu0 0.0
      %340 = vmatpush1.msra.mxu0 0.0
      %341 = vmatprep.subr.mxu0 0.0
      %342 = vmatpush1.msra.mxu0 0.0
      %343 = vmatprep.subr.mxu0 0.0
      %344 = vmatpush1.msra.mxu0 0.0
      %345 = vmatprep.subr.mxu0 0.0
      %346 = vmatpush1.msra.mxu0 0.0
      %347 = vmatprep.subr.mxu0 0.0
      %348 = vmatpush1.msra.mxu0 0.0
      %349 = vmatprep.subr.mxu0 0.0
      %350 = vmatpush1.msra.mxu0 0.0
      %351 = vmatprep.subr.mxu0 0.0
      %352 = vmatpush1.msra.mxu0 0.0
      %353 = vmatprep.subr.mxu0 0.0
      %354 = vmatpush1.msra.mxu0 0.0
      %355 = vmatprep.subr.mxu0 0.0
      %356 = vmatpush1.msra.mxu0 0.0
      %357 = vmatprep.subr.mxu0 0.0
      %358 = vmatpush1.msra.mxu0 0.0
      %359 = vmatprep.subr.mxu0 0.0
      %360 = vmatpush1.msra.mxu0 0.0
      %361 = vmatprep.subr.mxu0 0.0
      %362 = vmatpush1.msra.mxu0 0.0
      %363 = vmatprep.mubr.f32.mxu0 0.0
      %364 = vmatmul.mubr.f32.gmra.mrb[0].mxu0 %v291
      %v365 = vpop.f32.mrb[0].mxu0
      %v366 = vadd.f32 %v282, %v365
      %v367 = vpop.f32.mrb[0].mxu0
      %368 = vmatprep.mubr.f32.mxu0 0.0
      %369 = vmatmul.mubr.f32.gmra.mrb[0].mxu0 %v294
      %v370 = vpop.f32.mrb[0].mxu0
      %v371 = vadd.f32 %v287, %v370
      %v372 = vpop.f32.mrb[0].mxu0
      %373 = vdwg.mxu0
      %s374 = sadd.s32 %s167, 2
      %s375 = scalar_lea.vmem %s156, %s374
      %v376 = vld [vmem:[%s375] sm:$0xff]
      %v377 = vld [vmem:[%s375 + $0x8] sm:$0xff]
      %s378 = scalar_lea.vmem %s1, 224
      %v379 = vld [vmem:[%s378] sm:$0xff]
      %v380 = vld [vmem:[%s378 + $0x8] sm:$0xff]
      %v381 = vld [vmem:[%s378 + $0x10] sm:$0xff]
      %v382 = vld [vmem:[%s378 + $0x18] sm:$0xff]
      %v383 = vld [vmem:[%s378 + $0x20] sm:$0xff]
      %v384 = vld [vmem:[%s378 + $0x28] sm:$0xff]
      %v385 = vld [vmem:[%s378 + $0x30] sm:$0xff]
      %v386 = vld [vmem:[%s378 + $0x38] sm:$0xff]
      %v387 = vld [vmem:[%s378 + $0x40] sm:$0xff]
      %v388 = vld [vmem:[%s378 + $0x48] sm:$0xff]
      %v389 = vld [vmem:[%s378 + $0x50] sm:$0xff]
      %v390 = vld [vmem:[%s378 + $0x58] sm:$0xff]
      %v391 = vld [vmem:[%s378 + $0x60] sm:$0xff]
      %v392 = vld [vmem:[%s378 + $0x68] sm:$0xf]
      %v394 = vsel %vm204, %v376, 0
      %v397 = vsel %vm204, %v377, 0
      %v400 = vsel %vm211, %v392, 0
      %402 = vmatprep.subr.mxu0 0.0
      %403 = vmatpush1.msra.mxu0 %v379
      %404 = vmatprep.subr.mxu0 0.0
      %405 = vmatpush1.msra.mxu0 %v380
      %406 = vmatprep.subr.mxu0 0.0
      %407 = vmatpush1.msra.mxu0 %v381
      %408 = vmatprep.subr.mxu0 0.0
      %409 = vmatpush1.msra.mxu0 %v382
      %410 = vmatprep.subr.mxu0 0.0
      %411 = vmatpush1.msra.mxu0 %v383
      %412 = vmatprep.subr.mxu0 0.0
      %413 = vmatpush1.msra.mxu0 %v384
      %414 = vmatprep.subr.mxu0 0.0
      %415 = vmatpush1.msra.mxu0 %v385
      %416 = vmatprep.subr.mxu0 0.0
      %417 = vmatpush1.msra.mxu0 %v386
      %418 = vmatprep.subr.mxu0 0.0
      %419 = vmatpush1.msra.mxu0 %v387
      %420 = vmatprep.subr.mxu0 0.0
      %421 = vmatpush1.msra.mxu0 %v388
      %422 = vmatprep.subr.mxu0 0.0
      %423 = vmatpush1.msra.mxu0 %v389
      %424 = vmatprep.subr.mxu0 0.0
      %425 = vmatpush1.msra.mxu0 %v390
      %426 = vmatprep.subr.mxu0 0.0
      %427 = vmatpush1.msra.mxu0 %v391
      %428 = vmatprep.subr.mxu0 0.0
      %429 = vmatpush1.msra.mxu0 %v400
      %430 = vmatprep.subr.mxu0 0.0
      %431 = vmatpush1.msra.mxu0 0.0
      %432 = vmatprep.subr.mxu0 0.0
      %433 = vmatpush1.msra.mxu0 0.0
      %434 = vmatprep.subr.mxu0 0.0
      %435 = vmatpush1.msra.mxu0 0.0
      %436 = vmatprep.subr.mxu0 0.0
      %437 = vmatpush1.msra.mxu0 0.0
      %438 = vmatprep.subr.mxu0 0.0
      %439 = vmatpush1.msra.mxu0 0.0
      %440 = vmatprep.subr.mxu0 0.0
      %441 = vmatpush1.msra.mxu0 0.0
      %442 = vmatprep.subr.mxu0 0.0
      %443 = vmatpush1.msra.mxu0 0.0
      %444 = vmatprep.subr.mxu0 0.0
      %445 = vmatpush1.msra.mxu0 0.0
      %446 = vmatprep.subr.mxu0 0.0
      %447 = vmatpush1.msra.mxu0 0.0
      %448 = vmatprep.subr.mxu0 0.0
      %449 = vmatpush1.msra.mxu0 0.0
      %450 = vmatprep.subr.mxu0 0.0
      %451 = vmatpush1.msra.mxu0 0.0
      %452 = vmatprep.subr.mxu0 0.0
      %453 = vmatpush1.msra.mxu0 0.0
      %454 = vmatprep.subr.mxu0 0.0
      %455 = vmatpush1.msra.mxu0 0.0
      %456 = vmatprep.subr.mxu0 0.0
      %457 = vmatpush1.msra.mxu0 0.0
      %458 = vmatprep.subr.mxu0 0.0
      %459 = vmatpush1.msra.mxu0 0.0
      %460 = vmatprep.subr.mxu0 0.0
      %461 = vmatpush1.msra.mxu0 0.0
      %462 = vmatprep.subr.mxu0 0.0
      %463 = vmatpush1.msra.mxu0 0.0
      %464 = vmatprep.subr.mxu0 0.0
      %465 = vmatpush1.msra.mxu0 0.0
      %466 = vmatprep.mubr.f32.mxu0 0.0
      %467 = vmatmul.mubr.f32.gmra.mrb[0].mxu0 %v394
      %v468 = vpop.f32.mrb[0].mxu0
      %v469 = vadd.f32 0.0, %v468
      %v470 = vpop.f32.mrb[0].mxu0
      %471 = vmatprep.mubr.f32.mxu0 0.0
      %472 = vmatmul.mubr.f32.gmra.mrb[0].mxu0 %v397
      %v473 = vpop.f32.mrb[0].mxu0
      %v474 = vadd.f32 0.0, %v473
      %v475 = vpop.f32.mrb[0].mxu0
      %476 = vdwg.mxu0
      %v477 = vadd.f32 %v366, %v469
      %v478 = vadd.f32 %v371, %v474
      %vm479 = vcmp.ge.f32.partialorder %v477, 0.0
      %vm480 = vcmp.ge.f32.partialorder %v478, 0.0
      %v481 = vmul.f32 %v477, 0.01
      %v482 = vmul.f32 %v478, 0.01
      %v483 = vsel %vm479, %v477, %v481
      %v484 = vsel %vm480, %v478, %v482
      %485 = vst [vmem:[%s165] sm:$0xff] %v483
      %486 = vst [vmem:[%s165 + $0x8] sm:$0xff] %v484
      %s487 = smul.u32 2, %s18
      %p488 = scmp.lt.s32.totalorder %s17, 1
      %s489 = scalar_select %p488, %s17, 1
      %p490 = scmp.lt.s32.totalorder %s487, 1
      %s491 = scalar_select %p490, %s487, 1
      %s492 = smul.addr %s489, 2
      %s493 = sadd.s32 %s491, %s492
      %s494 = smul.addr %s493, 8
      %s495 = scalar_lea.vmem %s2, %s494
      // Predicated region
      $region29: #{_forward.1} parent=27 // pred_check
        %p496 = pneg %p92
      $region30: #{_forward.1} parent=27 // pred_check_branch
        %498 = sbr.rel (%p496) target = $region32
      $region31: #{_forward.1} parent=27 // pred_region
        %s499 = smul.u32 2, %s18
      $region32: #{_forward.1} parent=27 // pred_fallthru
        _
    $region28: #{_forward.1} parent=5 // pred_fallthru
      _
    %p500 = scmp.le.s32.totalorder 2, %s8
    // Predicated region
    $region33: #{_forward.1} parent=5 // pred_check
      %p501 = pneg %p500
    $region34: #{_forward.1} parent=5 // pred_check_branch
      %503 = sbr.rel (%p501) target = $region36
    $region35: #{_forward.1} parent=5 // pred_region
      %s504 = ssub.s32 %s8, 2
      // Predicated region
      $region37: #{_forward.1} parent=35 // pred_check
        %p505 = pneg %p98
      $region38: #{_forward.1} parent=35 // pred_check_branch
        %507 = sbr.rel (%p505) target = $region40
      $region39: #{_forward.1} parent=35 // pred_region
        %s508 = smul.u32 2, %s20
        %p509 = scmp.lt.s32.totalorder %s19, 1
        %s510 = scalar_select %p509, %s19, 1
        %p511 = scmp.lt.s32.totalorder %s508, 1
        %s512 = scalar_select %p511, %s508, 1
        %s513 = smul.addr %s510, 2
        %s514 = sadd.s32 %s512, %s513
        %s515 = smul.addr %s514, 8
        %s516 = scalar_lea.vmem %s2, %s515
      $region40: #{_forward.1} parent=35 // pred_fallthru
        _
    $region36: #{_forward.1} parent=5 // pred_fallthru
      _
  $region6: #{_forward.1} parent=0 // loop_footer
    %s12 = sadd.s32 1, %s8
  $region7: #{_forward.1} parent=0 // loop_footer_branch
    %7 = sbr.rel target = $region3
  $region8: #{_forward.1} parent=0 // loop_exit
    _

</llo_original>
